<compile_context>
chip_gen: v5e
topology: v5e:2x2
jax: 0.10.0
libtpu: 0.0.40
codegen_flags: <defaults>
</compile_context>

<pallas_src>
import functools

import jax
import jax.numpy as jnp
from jax import lax
from jax.experimental import pallas as pl
from jax.experimental.pallas import tpu as pltpu


def _layernorm_kernel(x_ref, w_ref, *rest, eps, bias_free):
    # x_ref/o_ref block: (1, C, T)  -- C on sublanes, T (spatial) on lanes
    # w_ref/b_ref block: (C, 1)     -- broadcast along lanes
    if bias_free:
        (o_ref,) = rest
        b_ref = None
    else:
        b_ref, o_ref = rest

    x = x_ref[0].astype(jnp.float32)                      # (C, T)

    # Single-pass stats: one sweep over the block (sum and sum of squares),
    # then var = E[x^2] - mu^2, clamped to guard f32 cancellation.
    inv_c = 1.0 / x.shape[0]
    s1 = jnp.sum(x, axis=0, keepdims=True)                # (1, T) sublane reduce
    s2 = jnp.sum(x * x, axis=0, keepdims=True)            # (1, T)
    mu = s1 * inv_c
    var = jnp.maximum(s2 * inv_c - mu * mu, 0.0)
    inv = lax.rsqrt(var + eps)                            # EUP rsqrt (free slot)

    # Restormer semantics: BiasFree divides the *un-centered* x by
    # sqrt(var-about-mean + eps); WithBias is a standard LayerNorm.
    # (Padded lanes of a ragged last block compute garbage here but are never
    # written back; there is no cross-lane mixing.)
    norm = (x * inv) if bias_free else ((x - mu) * inv)   # (C, T) f32

    out_dtype = o_ref.dtype
    if out_dtype == jnp.float32:
        y = norm * w_ref[...].astype(jnp.float32)
        if not bias_free:
            y = y + b_ref[...].astype(jnp.float32)
        o_ref[0] = y
    else:
        # Low-precision output: affine epilogue in the output dtype (bf16 VPU
        # is native on v6e/v7x -> ~half the VALU cost of doing it in f32).
        y = norm.astype(out_dtype) * w_ref[...].astype(out_dtype)
        if not bias_free:
            y = y + b_ref[...].astype(out_dtype)
        o_ref[0] = y


def _round_up(x, m):
    return -(-x // m) * m


def _pick_spatial_tile(HW, C, itemsize, N, max_block_bytes):
    """Lane-dense spatial tile width.

    Biggest multiple of 128 such that one (C, T) input block stays within
    max_block_bytes; fall back to the full extent when HW fits.  When N == 1
    and everything fits in one block, split spatially so a 'parallel' grid axis
    has >= 2 blocks (both v7x TensorCores run).
    """
    lanes_budget = max(128, (max_block_bytes // max(C * itemsize, 1)) // 128 * 128)
    if HW <= lanes_budget:
        if N == 1 and HW > 128:
            return min(_round_up(-(-HW // 2), 128), lanes_budget)
        return HW                       # full-extent block (no (8,128) constraint)
    return lanes_budget                 # multiple of 128; last block may be ragged


@functools.partial(jax.jit, static_argnames=("bias_free", "eps", "max_block_bytes"))
def layernorm_nchw(x, weight, bias=None, *, bias_free=False, eps=1e-5,
                   max_block_bytes=4 << 20):
    """Pallas port of LayerNorm(dim, LayerNorm_type).forward for NCHW input.

    x: (N, C, H, W); weight (C,), bias (C,) (ignored / may be None when
    bias_free=True).  Normalizes across C per spatial position.
    """
    N, C, H, W = x.shape
    HW = H * W
    x3 = x.reshape(N, C, HW)            # contiguous reshape: no data movement

    T = _pick_spatial_tile(HW, C, jnp.dtype(x.dtype).itemsize, N, max_block_bytes)
    grid = (N, pl.cdiv(HW, T))

    w2 = weight.reshape(C, 1).astype(x.dtype)
    args = [x3, w2]
    in_specs = [
        pl.BlockSpec((1, C, T), lambda n, j: (n, 0, j)),
        pl.BlockSpec((C, 1), lambda n, j: (0, 0)),
    ]
    if not bias_free:
        b2 = bias.reshape(C, 1).astype(x.dtype)
        args.append(b2)
        in_specs.append(pl.BlockSpec((C, 1), lambda n, j: (0, 0)))

    kernel = functools.partial(_layernorm_kernel, eps=eps, bias_free=bias_free)

    out = pl.pallas_call(
        kernel,
        out_shape=jax.ShapeDtypeStruct((N, C, HW), x.dtype),
        grid_spec=pltpu.PrefetchScalarGridSpec(
            num_scalar_prefetch=0,
            grid=grid,
            in_specs=in_specs,
            out_specs=pl.BlockSpec((1, C, T), lambda n, j: (n, 0, j)),
        ),
        compiler_params=pltpu.CompilerParams(
            # Both axes are independent -> megacore-shardable on v7x.
            dimension_semantics=("parallel", "parallel"),
            # v5e's scoped-VMEM default is 16 MiB; raise it so large lane-dense
            # blocks keep full double-buffering.  Default block budget (4 MiB)
            # keeps total usage well under v7x's 64 MiB physical VMEM.
            vmem_limit_bytes=64 << 20,
        ),
    )(*args)

    return out.reshape(N, C, H, W)


def _reference(x, weight, bias, *, bias_free=False):
    """Pure-JAX reference matching to_4d(body(to_3d(x)), h, w)."""
    N, C, H, W = x.shape
    x3 = jnp.transpose(x, (0, 2, 3, 1)).reshape(N, H * W, C)   # b (h w) c
    mu = jnp.mean(x3, axis=-1, keepdims=True)
    var = jnp.mean(jnp.square(x3 - mu), axis=-1, keepdims=True)
    if bias_free:
        y = x3 / jnp.sqrt(var + 1e-5) * weight
    else:
        y = (x3 - mu) / jnp.sqrt(var + 1e-5) * weight + bias
    return jnp.transpose(y.reshape(N, H, W, C), (0, 3, 1, 2))


if __name__ == "__main__":
    key = jax.random.PRNGKey(0)
    kx, kw, kb, kx2 = jax.random.split(key, 4)

    # NCHW input consistent with the module's usage: batch=2, channels=4, 16x16.
    x = jax.random.normal(kx, (2, 4, 16, 16), dtype=jnp.float32)
    C = x.shape[1]
    weight = jnp.ones((C,), jnp.float32) + 0.1 * jax.random.normal(kw, (C,), jnp.float32)
    bias = 0.1 * jax.random.normal(kb, (C,), jnp.float32)

    # 1) WithBias_LayerNorm (the module's default branch).
    out = jax.block_until_ready(layernorm_nchw(x, weight, bias, bias_free=False))
    ref = _reference(x, weight, bias, bias_free=False)
    assert out.shape == x.shape
    assert jnp.allclose(out, ref, atol=1e-5, rtol=1e-5), "WithBias mismatch vs reference"

    # 2) BiasFree_LayerNorm branch (no bias operand at all).
    out_bf = jax.block_until_ready(layernorm_nchw(x, weight, bias_free=True))
    ref_bf = _reference(x, weight, jnp.zeros((C,), jnp.float32), bias_free=True)
    assert jnp.allclose(out_bf, ref_bf, atol=1e-5, rtol=1e-5), "BiasFree mismatch vs reference"

    # 3) N == 1: exercise the spatial split (grid becomes (1, 2)) for v7x megacore.
    x1 = jax.random.normal(kx2, (1, 4, 16, 16), dtype=jnp.float32)
    out1 = jax.block_until_ready(layernorm_nchw(x1, weight, bias, bias_free=False))
    ref1 = _reference(x1, weight, bias, bias_free=False)
    assert jnp.allclose(out1, ref1, atol=1e-5, rtol=1e-5), "N==1 split mismatch vs reference"

    # 4) Multi-block spatial tiling with a ragged last block (tiny block budget).
    x2 = jax.random.normal(kx, (2, 8, 24, 24), dtype=jnp.float32)   # HW=576 = 4*128 + 64
    w8 = jnp.ones((8,), jnp.float32) + 0.05 * jax.random.normal(kw, (8,), jnp.float32)
    b8 = 0.05 * jax.random.normal(kb, (8,), jnp.float32)
    out2 = jax.block_until_ready(
        layernorm_nchw(x2, w8, b8, bias_free=False, max_block_bytes=8 * 128 * 4))
    ref2 = _reference(x2, w8, b8, bias_free=False)
    assert jnp.allclose(out2, ref2, atol=1e-5, rtol=1e-5), "Ragged tiling mismatch vs reference"

    print("KERNEL_OK")
</pallas_src>

<mosaic_0001>
module attributes {stable_mosaic.version = 11 : i64} {
  func.func @_layernorm_kernel(%arg0: i32, %arg1: i32, %arg2: memref<1x4x256xf32, #tpu.memory_space<vmem>>, %arg3: memref<4x1xf32, #tpu.memory_space<vmem>>, %arg4: memref<4x1xf32, #tpu.memory_space<vmem>>, %arg5: memref<1x4x256xf32, #tpu.memory_space<vmem>>) attributes {dimension_semantics = [#tpu.dimension_semantics<parallel>, #tpu.dimension_semantics<parallel>], iteration_bounds = array<i64: 2, 1>, scalar_prefetch = 0 : i64, scratch_operands = 0 : i64, tpu.core_type = #tpu.core_type<tc>, window_params = [{transform_indices = @transform_0, window_bounds = array<i64: 1, 4, 256>}, {pipeline_mode = #tpu.pipeline_mode<synchronous>, transform_indices = @transform_1, window_bounds = array<i64: 4, 1>}, {pipeline_mode = #tpu.pipeline_mode<synchronous>, transform_indices = @transform_2, window_bounds = array<i64: 4, 1>}, {transform_indices = @transform_3, window_bounds = array<i64: 1, 4, 256>}]} {
    %c0 = arith.constant 0 : index
    %c0_0 = arith.constant 0 : index
    %c0_1 = arith.constant 0 : index
    %0 = vector.load %arg2[%c0, %c0_0, %c0_1] : memref<1x4x256xf32, #tpu.memory_space<vmem>>, vector<1x4x256xf32>
    %1 = vector.shape_cast %0 : vector<1x4x256xf32> to vector<4x256xf32>
    %cst = arith.constant dense<0.000000e+00> : vector<256xf32>
    %2 = vector.multi_reduction <add>, %1, %cst [0] : vector<4x256xf32> to vector<256xf32>
    %3 = vector.shape_cast %2 : vector<256xf32> to vector<1x256xf32>
    %4 = arith.mulf %1, %1 : vector<4x256xf32>
    %cst_2 = arith.constant dense<0.000000e+00> : vector<256xf32>
    %5 = vector.multi_reduction <add>, %4, %cst_2 [0] : vector<4x256xf32> to vector<256xf32>
    %6 = vector.shape_cast %5 : vector<256xf32> to vector<1x256xf32>
    %cst_3 = arith.constant 2.500000e-01 : f32
    %7 = vector.broadcast %cst_3 : f32 to vector<1x256xf32>
    %8 = arith.mulf %3, %7 : vector<1x256xf32>
    %cst_4 = arith.constant 2.500000e-01 : f32
    %9 = vector.broadcast %cst_4 : f32 to vector<1x256xf32>
    %10 = arith.mulf %6, %9 : vector<1x256xf32>
    %11 = arith.mulf %8, %8 : vector<1x256xf32>
    %12 = arith.subf %10, %11 : vector<1x256xf32>
    %cst_5 = arith.constant 0.000000e+00 : f32
    %13 = vector.broadcast %cst_5 : f32 to vector<1x256xf32>
    %14 = arith.maximumf %12, %13 : vector<1x256xf32>
    %cst_6 = arith.constant 9.99999974E-6 : f32
    %15 = vector.broadcast %cst_6 : f32 to vector<1x256xf32>
    %16 = arith.addf %14, %15 : vector<1x256xf32>
    %17 = math.rsqrt %16 : vector<1x256xf32>
    %18 = vector.broadcast %8 : vector<1x256xf32> to vector<4x256xf32>
    %19 = arith.subf %1, %18 : vector<4x256xf32>
    %20 = vector.broadcast %17 : vector<1x256xf32> to vector<4x256xf32>
    %21 = arith.mulf %19, %20 : vector<4x256xf32>
    %c0_7 = arith.constant 0 : index
    %c0_8 = arith.constant 0 : index
    %22 = vector.load %arg3[%c0_7, %c0_8] : memref<4x1xf32, #tpu.memory_space<vmem>>, vector<4x1xf32>
    %23 = vector.broadcast %22 : vector<4x1xf32> to vector<4x256xf32>
    %24 = arith.mulf %21, %23 : vector<4x256xf32>
    %c0_9 = arith.constant 0 : index
    %c0_10 = arith.constant 0 : index
    %25 = vector.load %arg4[%c0_9, %c0_10] : memref<4x1xf32, #tpu.memory_space<vmem>>, vector<4x1xf32>
    %26 = vector.broadcast %25 : vector<4x1xf32> to vector<4x256xf32>
    %27 = arith.addf %24, %26 : vector<4x256xf32>
    %c0_11 = arith.constant 0 : index
    %c0_12 = arith.constant 0 : index
    %c0_13 = arith.constant 0 : index
    %28 = vector.load %arg5[%c0_11, %c0_12, %c0_13] : memref<1x4x256xf32, #tpu.memory_space<vmem>>, vector<1x4x256xf32>
    %29 = vector.shape_cast %28 : vector<1x4x256xf32> to vector<4x256xf32>
    %30 = vector.shape_cast %27 : vector<4x256xf32> to vector<1x4x256xf32>
    tpu.vector_store %arg5[%c0_11, %c0_12, %c0_13], %30 {strides = array<i32>} : memref<1x4x256xf32, #tpu.memory_space<vmem>>, vector<1x4x256xf32>,
    return
  }
  func.func @transform_0(%arg0: i32, %arg1: i32) -> (i32, i32, i32) {
    %c0_i32 = arith.constant 0 : i32
    %c0_i32_0 = arith.constant 0 : i32
    return %arg0, %c0_i32, %arg1 : i32, i32, i32
  }
  func.func @transform_1(%arg0: i32, %arg1: i32) -> (i32, i32) {
    %c0_i32 = arith.constant 0 : i32
    %c0_i32_0 = arith.constant 0 : i32
    %c0_i32_1 = arith.constant 0 : i32
    return %c0_i32, %c0_i32_0 : i32, i32
  }
  func.func @transform_2(%arg0: i32, %arg1: i32) -> (i32, i32) {
    %c0_i32 = arith.constant 0 : i32
    %c0_i32_0 = arith.constant 0 : i32
    %c0_i32_1 = arith.constant 0 : i32
    return %c0_i32, %c0_i32_0 : i32, i32
  }
  func.func @transform_3(%arg0: i32, %arg1: i32) -> (i32, i32, i32) {
    %c0_i32 = arith.constant 0 : i32
    %c0_i32_0 = arith.constant 0 : i32
    return %arg0, %c0_i32, %arg1 : i32, i32, i32
  }
}

</mosaic_0001>

<llo_original>
// kernel: layernorm_nchw.1
$region0: #{layernorm_nchw.1}
  #allocation0 [shape = 'u32[]', space=smem, size = 0x4, offset = 0x4, fixed_abs, tag = 'smem constant byte address 0x4 - core index']
  #allocation1 [shape = 'u32[72,128]{1,0:T(1,128)}', space=vmem, size = 0x9000, scoped, tag = 'internal scratch']
  %s0 = inlined_call_operand.vmem [shape: f32[2,4,256], index: 0, kind: input, shape index: {}]
  %s1 = inlined_call_operand.vmem [shape: f32[4,1], index: 1, kind: input, shape index: {}]
  %s2 = inlined_call_operand.vmem [shape: f32[4,1], index: 2, kind: input, shape index: {}]
  %s3 = inlined_call_operand.vmem [shape: f32[2,4,256], index: 3, kind: output, shape index: {}]
  %s4 = sld [smem:[#allocation0]]
  $region45: #{layernorm_nchw.1} parent=0
    _
  %s6 = ssub.s32 1, %s4
  %s7 = scalar_select 0, %s6, %s4
  loop: start=0, step=1, limit=4
  $region2: #{layernorm_nchw.1} parent=0 // loop_pre_header
    _
  $region3: #{layernorm_nchw.1} parent=0 // loop_header
    %s9 = sphi 0, %s13
    %p10 = scmp.ge.s32.totalorder %s9, 4
    %s16 = sphi 0, %s28
    %s17 = sphi 0, %s24
    %s18 = sphi 0, %s16
    %s19 = sphi 0, %s17
    %s20 = sphi 0, %s18
    %s21 = sphi 0, %s19
    %s33 = sphi 0, %s35
    %s36 = sphi 0, %s33
    %s37 = sphi 0, %s36
    %s53 = sphi 0, %s37
    %s57 = sphi 0, %s57
    %s59 = sphi 0, %s57
    %s60 = sphi 0, %s59
    %s74 = sphi 0, %s60
    %s78 = sphi 0, %s78
    %s80 = sphi 0, %s78
    %s81 = sphi 0, %s80
    %s95 = sphi 0, %s81
    %s103 = sphi 0, %s105
    %s106 = sphi 0, %s103
    %s107 = sphi 0, %s106
    %s123 = sphi 0, %s107
  $region4: #{layernorm_nchw.1} parent=0 // loop_header_branch
    %12 = sbr.rel (%p10) target = $region8
  $region5: #{layernorm_nchw.1} parent=0 // loop_body
    %s14 = ssub.s32 %s9, 1
    %s15 = ssub.s32 %s9, 2
    %s22 = sadd.s32 1, %s17
    %p23 = scmp.ge.s32.totalorder %s22, 1
    %s24 = scalar_select %p23, 0, %s22
    %s25 = sadd.s32 1, %s16
    %s26 = scalar_select %p23, %s25, %s16
    %p27 = scmp.ge.s32.totalorder %s26, 2
    %s28 = scalar_select %p27, 0, %s26
    %s29 = ssub.s32 %s16, %s28
    %s30 = ssub.s32 %s17, %s24
    %s31 = sor.u32 %s29, %s30
    %p32 = scmp.eq.s32.totalorder %s31, 0
    %s34 = sadd.s32 %s33, 1
    %s35 = scalar_select %p32, %s33, %s34
    %p38 = pneg %p32
    %p39 = scmp.eq.s32.totalorder %s9, 1
    %p40 = por %p38, %p39
    %p41 = scmp.ne.s32.totalorder %s33, %s36
    %p42 = scmp.eq.s32.totalorder %s9, 0
    %p43 = por %p41, %p42
    %p44 = scmp.ne.s32.totalorder %s33, %s36
    %p45 = scmp.eq.s32.totalorder %s14, 1
    %p46 = por %p44, %p45
    %p47 = scmp.ne.s32.totalorder %s36, %s37
    %p48 = scmp.eq.s32.totalorder %s14, 0
    %p49 = por %p47, %p48
    %p50 = scmp.ne.s32.totalorder %s36, %s37
    %p51 = scmp.eq.s32.totalorder %s15, 1
    %p52 = por %p50, %p51
    %p54 = scmp.ne.s32.totalorder %s37, %s53
    %p55 = scmp.eq.s32.totalorder %s15, 0
    %p56 = por %p54, %p55
    %s58 = sadd.s32 %s57, 1
    %p61 = scmp.eq.s32.totalorder %s9, 1
    %p62 = scmp.ne.s32.totalorder %s57, %s59
    %p63 = scmp.eq.s32.totalorder %s9, 0
    %p64 = por %p62, %p63
    %p65 = scmp.ne.s32.totalorder %s57, %s59
    %p66 = scmp.eq.s32.totalorder %s14, 1
    %p67 = por %p65, %p66
    %p68 = scmp.ne.s32.totalorder %s59, %s60
    %p69 = scmp.eq.s32.totalorder %s14, 0
    %p70 = por %p68, %p69
    %p71 = scmp.ne.s32.totalorder %s59, %s60
    %p72 = scmp.eq.s32.totalorder %s15, 1
    %p73 = por %p71, %p72
    %p75 = scmp.ne.s32.totalorder %s60, %s74
    %p76 = scmp.eq.s32.totalorder %s15, 0
    %p77 = por %p75, %p76
    %s79 = sadd.s32 %s78, 1
    %p82 = scmp.eq.s32.totalorder %s9, 1
    %p83 = scmp.ne.s32.totalorder %s78, %s80
    %p84 = scmp.eq.s32.totalorder %s9, 0
    %p85 = por %p83, %p84
    %p86 = scmp.ne.s32.totalorder %s78, %s80
    %p87 = scmp.eq.s32.totalorder %s14, 1
    %p88 = por %p86, %p87
    %p89 = scmp.ne.s32.totalorder %s80, %s81
    %p90 = scmp.eq.s32.totalorder %s14, 0
    %p91 = por %p89, %p90
    %p92 = scmp.ne.s32.totalorder %s80, %s81
    %p93 = scmp.eq.s32.totalorder %s15, 1
    %p94 = por %p92, %p93
    %p96 = scmp.ne.s32.totalorder %s81, %s95
    %p97 = scmp.eq.s32.totalorder %s15, 0
    %p98 = por %p96, %p97
    %s99 = ssub.s32 %s16, %s28
    %s100 = ssub.s32 %s17, %s24
    %s101 = sor.u32 %s99, %s100
    %p102 = scmp.eq.s32.totalorder %s101, 0
    %s104 = sadd.s32 %s103, 1
    %s105 = scalar_select %p102, %s103, %s104
    %p108 = pneg %p102
    %p109 = scmp.eq.s32.totalorder %s9, 1
    %p110 = por %p108, %p109
    %p111 = scmp.ne.s32.totalorder %s103, %s106
    %p112 = scmp.eq.s32.totalorder %s9, 0
    %p113 = por %p111, %p112
    %p114 = scmp.ne.s32.totalorder %s103, %s106
    %p115 = scmp.eq.s32.totalorder %s14, 1
    %p116 = por %p114, %p115
    %p117 = scmp.ne.s32.totalorder %s106, %s107
    %p118 = scmp.eq.s32.totalorder %s14, 0
    %p119 = por %p117, %p118
    %p120 = scmp.ne.s32.totalorder %s106, %s107
    %p121 = scmp.eq.s32.totalorder %s15, 1
    %p122 = por %p120, %p121
    %p124 = scmp.ne.s32.totalorder %s107, %s123
    %p125 = scmp.eq.s32.totalorder %s15, 0
    %p126 = por %p124, %p125
    %p127 = scmp.le.s32.totalorder 1, %s9
    %p128 = scmp.lt.s32.totalorder %s9, 3
    %p129 = pnand %p127, %p128
    %p130 = pneg %p129
    // Predicated region
    $region9: #{layernorm_nchw.1} parent=5 // pred_check
      _
    $region10: #{layernorm_nchw.1} parent=5 // pred_check_branch
      %132 = sbr.rel (%p129) target = $region12
    $region11: #{layernorm_nchw.1} parent=5 // pred_region
      %s133 = ssub.s32 %s9, 1
      // Predicated region
      $region13: #{layernorm_nchw.1} parent=11 // pred_check
        %p134 = pneg %p70
      $region14: #{layernorm_nchw.1} parent=11 // pred_check_branch
        %136 = sbr.rel (%p134) target = $region16
      $region15: #{layernorm_nchw.1} parent=11 // pred_region
        _
      $region16: #{layernorm_nchw.1} parent=11 // pred_fallthru
        _
      // Predicated region
      $region17: #{layernorm_nchw.1} parent=11 // pred_check
        %p137 = pneg %p91
      $region18: #{layernorm_nchw.1} parent=11 // pred_check_branch
        %139 = sbr.rel (%p137) target = $region20
      $region19: #{layernorm_nchw.1} parent=11 // pred_region
        _
      $region20: #{layernorm_nchw.1} parent=11 // pred_fallthru
        _
    $region12: #{layernorm_nchw.1} parent=5 // pred_fallthru
      _
    %p140 = scmp.lt.s32.totalorder %s9, 2
    // Predicated region
    $region21: #{layernorm_nchw.1} parent=5 // pred_check
      %p141 = pneg %p140
    $region22: #{layernorm_nchw.1} parent=5 // pred_check_branch
      %143 = sbr.rel (%p141) target = $region24
    $region23: #{layernorm_nchw.1} parent=5 // pred_region
      // Predicated region
      $region25: #{layernorm_nchw.1} parent=23 // pred_check
        %p144 = pneg %p43
      $region26: #{layernorm_nchw.1} parent=23 // pred_check_branch
        %146 = sbr.rel (%p144) target = $region28
      $region27: #{layernorm_nchw.1} parent=23 // pred_region
        %s147 = smul.u32 2, %s17
        %p148 = scmp.lt.s32.totalorder %s16, 1
        %s149 = scalar_select %p148, %s16, 1
        %p150 = scmp.lt.s32.totalorder %s147, 1
        %s151 = scalar_select %p150, %s147, 1
        %s152 = smul.addr %s149, 2
        %s153 = sadd.s32 %s151, %s152
        %s154 = smul.addr %s153, 4
        %s155 = scalar_lea.vmem %s0, %s154
        %s156 = smul.u32 2, %s17
      $region28: #{layernorm_nchw.1} parent=23 // pred_fallthru
        _
    $region24: #{layernorm_nchw.1} parent=5 // pred_fallthru
      _
    %p157 = scmp.le.s32.totalorder 1, %s9
    %p158 = scmp.lt.s32.totalorder %s9, 3
    %p159 = pnand %p157, %p158
    %p160 = pneg %p159
    // Predicated region
    $region29: #{layernorm_nchw.1} parent=5 // pred_check
      _
    $region30: #{layernorm_nchw.1} parent=5 // pred_check_branch
      %162 = sbr.rel (%p159) target = $region32
    $region31: #{layernorm_nchw.1} parent=5 // pred_region
      %s163 = ssub.s32 %s9, 1
      %s164 = smul.u32 2, %s19
      %p165 = scmp.lt.s32.totalorder %s18, 1
      %s166 = scalar_select %p165, %s18, 1
      %p167 = scmp.lt.s32.totalorder %s164, 1
      %s168 = scalar_select %p167, %s164, 1
      %s169 = smul.addr %s166, 2
      %s170 = sadd.s32 %s168, %s169
      %s171 = smul.addr %s170, 4
      %s172 = scalar_lea.vmem %s0, %s171
      %p173 = pneg %p49
      %p174 = pneg %p46
      %p175 = pneg %p70
      %p176 = pneg %p67
      %p177 = pneg %p91
      %p178 = pneg %p88
      %p179 = pneg %p119
      %p180 = pneg %p116
      %s181 = smul.u32 2, %s19
      %p182 = scmp.lt.s32.totalorder %s18, 1
      %s183 = scalar_select %p182, %s18, 1
      %p184 = scmp.lt.s32.totalorder %s181, 1
      %s185 = scalar_select %p184, %s181, 1
      %s186 = smul.addr %s183, 2
      %s187 = sadd.s32 %s185, %s186
      %s188 = smul.addr %s187, 4
      %s189 = scalar_lea.vmem %s3, %s188
      %s190 = smul.u32 2, %s19
      %p191 = scmp.lt.s32.totalorder %s18, 1
      %s192 = scalar_select %p191, %s18, 1
      %p193 = scmp.lt.s32.totalorder %s190, 1
      %s194 = scalar_select %p193, %s190, 1
      %s195 = smul.addr %s192, 2
      %s196 = sadd.s32 %s194, %s195
      %s197 = smul.addr %s196, 4
      %s198 = scalar_lea.vmem %s0, %s197
      %s199 = smul.u32 2, %s19
      %s200 = smul.u32 2, %s19
      %p201 = scmp.lt.s32.totalorder %s18, 1
      %s202 = scalar_select %p201, %s18, 1
      %p203 = scmp.lt.s32.totalorder %s200, 1
      %s204 = scalar_select %p203, %s200, 1
      %s205 = smul.addr %s202, 2
      %s206 = sadd.s32 %s204, %s205
      %s207 = smul.addr %s206, 4
      %s208 = scalar_lea.vmem %s3, %s207
      %s209 = smul.u32 2, %s19
      %v210 = vld [vmem:[%s198] sm:$0xff]
      %212 = vst [vmem:[#allocation1] ss:$2 sm:$0xff] %v210
      %v213 = vld.sshfl [vmem:[#allocation1] sm:$0xff pattern:$0x75316420]
      %v214 = vld.sshfl [vmem:[#allocation1 + $0x8] sm:$0xff pattern:$0x75316420]
      %vm217 = vcmask 1043456
      %v218 = vsel %vm217, %v213, 0.0
      %v219 = vrot.slane %v218, 4
      %v220 = vadd.f32 %v218, %v219
      %v221 = vrot.slane %v220, 2
      %v222 = vadd.f32 %v220, %v221
      %v223 = vrot.slane %v222, 1
      %v224 = vadd.f32 %v222, %v223
      %v225 = vsel %vm217, %v214, 0.0
      %v226 = vrot.slane %v225, 4
      %v227 = vadd.f32 %v225, %v226
      %v228 = vrot.slane %v227, 2
      %v229 = vadd.f32 %v227, %v228
      %v230 = vrot.slane %v229, 1
      %v231 = vadd.f32 %v229, %v230
      %v232 = vmul.f32 %v210, %v210
      %234 = vst [vmem:[#allocation1] ss:$2 sm:$0xff] %v232
      %v235 = vld.sshfl [vmem:[#allocation1] sm:$0xff pattern:$0x75316420]
      %v236 = vld.sshfl [vmem:[#allocation1 + $0x8] sm:$0xff pattern:$0x75316420]
      %v239 = vsel %vm217, %v235, 0.0
      %v240 = vrot.slane %v239, 4
      %v241 = vadd.f32 %v239, %v240
      %v242 = vrot.slane %v241, 2
      %v243 = vadd.f32 %v241, %v242
      %v244 = vrot.slane %v243, 1
      %v245 = vadd.f32 %v243, %v244
      %v246 = vsel %vm217, %v236, 0.0
      %v247 = vrot.slane %v246, 4
      %v248 = vadd.f32 %v246, %v247
      %v249 = vrot.slane %v248, 2
      %v250 = vadd.f32 %v248, %v249
      %v251 = vrot.slane %v250, 1
      %v252 = vadd.f32 %v250, %v251
      %v253 = vmul.f32 %v224, 0.25
      %v254 = vmul.f32 %v231, 0.25
      %v255 = vmul.f32 %v245, 0.25
      %v256 = vmul.f32 %v252, 0.25
      %v257 = vmul.f32 %v253, %v253
      %v258 = vmul.f32 %v254, %v254
      %v259 = vsub.f32 %v255, %v257
      %v260 = vsub.f32 %v256, %v258
      %v261 = vmax.f32 %v259, 0.0
      %v262 = vmax.f32 %v260, 0.0
      %v263 = vadd.f32 %v261, 1e-05
      %v264 = vadd.f32 %v262, 1e-05
      %v265 = vrsqrt.pop %v263
      %v266 = vmul.f32 %v265, %v263
      %v267 = vmul.f32 %v266, %v265
      %v268 = vmul.f32 0.5, %v267
      %v269 = vsub.f32 1.5, %v268
      %v270 = vmul.f32 %v265, %v269
      %vm271 = vweird.f32 %v263
      %vm272 = vweird.f32 %v265
      %vm273 = vmor %vm271, %vm272
      %v274 = vsel %vm273, %v265, %v270
      %v275 = vrsqrt.pop %v264
      %v276 = vmul.f32 %v275, %v264
      %v277 = vmul.f32 %v276, %v275
      %v278 = vmul.f32 0.5, %v277
      %v279 = vsub.f32 1.5, %v278
      %v280 = vmul.f32 %v275, %v279
      %vm281 = vweird.f32 %v264
      %vm282 = vweird.f32 %v275
      %vm283 = vmor %vm281, %vm282
      %v284 = vsel %vm283, %v275, %v280
      %v287 = vrot.slane %v254, 4
      %v288 = vsel %vm217, %v253, %v287
      %v290 = vsub.f32 %v210, %v288
      %v293 = vrot.slane %v284, 4
      %v294 = vsel %vm217, %v274, %v293
      %v296 = vmul.f32 %v290, %v294
      %v297 = vld [vmem:[%s1] sm:$0xf]
      %299 = vset.pattern.permute.xlu0 0
      %300 = vperm.xlu0 %299, %v297
      %v301 = vpop.permute.xlu0 %300
      %v303 = vunpack.c.l.s4 839922192
      %v304 = vunpack.c.0.s8 %v303
      %v305 = vperm.slane %v301, %v304
      %v307 = vmul.f32 %v296, %v305
      %v308 = vld [vmem:[%s2] sm:$0xf]
      %310 = vset.pattern.permute.xlu0 0
      %311 = vperm.xlu0 %310, %v308
      %v312 = vpop.permute.xlu0 %311
      %v314 = vunpack.c.l.s4 839922192
      %v315 = vunpack.c.0.s8 %v314
      %v316 = vperm.slane %v312, %v315
      %v318 = vadd.f32 %v307, %v316
      %319 = vst [vmem:[%s208] sm:$0xff] %v318
      %s320 = smul.u32 2, %s19
      %p321 = scmp.lt.s32.totalorder %s18, 1
      %s322 = scalar_select %p321, %s18, 1
      %p323 = scmp.lt.s32.totalorder %s320, 1
      %s324 = scalar_select %p323, %s320, 1
      %s325 = smul.addr %s322, 2
      %s326 = sadd.s32 %s324, %s325
      %s327 = smul.addr %s326, 4
      %s328 = scalar_lea.vmem %s3, %s327
      // Predicated region
      $region33: #{layernorm_nchw.1} parent=31 // pred_check
        %p329 = pneg %p116
      $region34: #{layernorm_nchw.1} parent=31 // pred_check_branch
        %331 = sbr.rel (%p329) target = $region36
      $region35: #{layernorm_nchw.1} parent=31 // pred_region
        %s332 = smul.u32 2, %s19
      $region36: #{layernorm_nchw.1} parent=31 // pred_fallthru
        _
    $region32: #{layernorm_nchw.1} parent=5 // pred_fallthru
      _
    %p333 = scmp.le.s32.totalorder 2, %s9
    // Predicated region
    $region37: #{layernorm_nchw.1} parent=5 // pred_check
      %p334 = pneg %p333
    $region38: #{layernorm_nchw.1} parent=5 // pred_check_branch
      %336 = sbr.rel (%p334) target = $region40
    $region39: #{layernorm_nchw.1} parent=5 // pred_region
      %s337 = ssub.s32 %s9, 2
      // Predicated region
      $region41: #{layernorm_nchw.1} parent=39 // pred_check
        %p338 = pneg %p122
      $region42: #{layernorm_nchw.1} parent=39 // pred_check_branch
        %340 = sbr.rel (%p338) target = $region44
      $region43: #{layernorm_nchw.1} parent=39 // pred_region
        %s341 = smul.u32 2, %s21
        %p342 = scmp.lt.s32.totalorder %s20, 1
        %s343 = scalar_select %p342, %s20, 1
        %p344 = scmp.lt.s32.totalorder %s341, 1
        %s345 = scalar_select %p344, %s341, 1
        %s346 = smul.addr %s343, 2
        %s347 = sadd.s32 %s345, %s346
        %s348 = smul.addr %s347, 4
        %s349 = scalar_lea.vmem %s3, %s348
      $region44: #{layernorm_nchw.1} parent=39 // pred_fallthru
        _
    $region40: #{layernorm_nchw.1} parent=5 // pred_fallthru
      _
  $region6: #{layernorm_nchw.1} parent=0 // loop_footer
    %s13 = sadd.s32 1, %s9
  $region7: #{layernorm_nchw.1} parent=0 // loop_footer_branch
    %8 = sbr.rel target = $region3
  $region8: #{layernorm_nchw.1} parent=0 // loop_exit
    _

</llo_original>
